<compile_context>
chip_gen: v7x
topology: tpu7x:2x2x1
jax: 0.10.0
libtpu: 0.0.40
codegen_flags: <defaults>
</compile_context>

<pallas_src>
import functools

import jax
import jax.numpy as jnp
import numpy as np
from jax import lax, random
from jax.experimental import pallas as pl
from jax.experimental.pallas import tpu as pltpu

BN_EPS = 1e-5


# -----------------------------------------------------------------------------
# Kernel 1: row-tiled (rows x K) @ (K x C) matmul + folded-BN affine (+ ReLU)
# -----------------------------------------------------------------------------
def _matmul_bn_act_kernel(x_ref, w_ref, s_ref, b_ref, o_ref, *, relu):
    y = jnp.dot(x_ref[...], w_ref[...], preferred_element_type=jnp.float32)
    y = y * s_ref[...] + b_ref[...]
    if relu:
        y = jnp.maximum(y, 0.0)
    o_ref[...] = y.astype(o_ref.dtype)


def matmul_bn_act(x, w, scale, bias, *, relu, out_dtype, tile_rows=256):
    """x: (N, K) bf16, w: (K, C) bf16, scale/bias: (C,) f32 -> (N, C) out_dtype."""
    N, K = x.shape
    C = w.shape[1]
    tile = min(tile_rows, N)          # ragged last tile handled by Pallas (rows are independent)
    return pl.pallas_call(
        functools.partial(_matmul_bn_act_kernel, relu=relu),
        out_shape=jax.ShapeDtypeStruct((N, C), out_dtype),
        grid=(pl.cdiv(N, tile),),
        in_specs=[
            pl.BlockSpec((tile, K), lambda i: (i, 0)),
            pl.BlockSpec((K, C), lambda i: (0, 0)),
            pl.BlockSpec((1, C), lambda i: (0, 0)),
            pl.BlockSpec((1, C), lambda i: (0, 0)),
        ],
        out_specs=pl.BlockSpec((tile, C), lambda i: (i, 0)),
        compiler_params=pltpu.CompilerParams(dimension_semantics=("parallel",)),
    )(x, w, scale.reshape(1, C), bias.reshape(1, C))


# -----------------------------------------------------------------------------
# Kernel 2: 3x3 grouped conv + folded-BN + ReLU, fused (no im2col in HBM)
# -----------------------------------------------------------------------------
def _gconv3x3_bn_relu_kernel(xp_ref, w_ref, s_ref, b_ref, o_ref, *,
                             cardinality, cg, ho, wo, stride):
    # xp_ref: (1, Hp, Wp, Cmid) zero-padded bf16 activations for one image.
    # w_ref:  (cardinality, 9, cg, cg) per-group per-tap weights (bf16).
    for g in range(cardinality):
        lo, hi = g * cg, (g + 1) * cg
        acc = jnp.zeros((ho * wo, cg), jnp.float32)
        for ky in range(3):
            for kx in range(3):
                if stride == 1:
                    tap = xp_ref[0, ky:ky + ho, kx:kx + wo, lo:hi]
                else:
                    tap = xp_ref[0,
                                 pl.ds(ky, ho, stride),
                                 pl.ds(kx, wo, stride),
                                 pl.ds(lo, cg)]
                acc += jnp.dot(tap.reshape(ho * wo, cg),
                               w_ref[g, ky * 3 + kx],
                               preferred_element_type=jnp.float32)
        y = acc * s_ref[:, lo:hi] + b_ref[:, lo:hi]
        o_ref[0, :, lo:hi] = jnp.maximum(y, 0.0).astype(o_ref.dtype)


def grouped_conv3x3_bn_relu(xp, w2g, scale, bias, *, cardinality, cg, ho, wo,
                            stride, out_dtype):
    B, Hp, Wp, Cmid = xp.shape
    kernel = functools.partial(_gconv3x3_bn_relu_kernel, cardinality=cardinality,
                               cg=cg, ho=ho, wo=wo, stride=stride)
    return pl.pallas_call(
        kernel,
        out_shape=jax.ShapeDtypeStruct((B, ho * wo, Cmid), out_dtype),
        grid=(B,),
        in_specs=[
            pl.BlockSpec((1, Hp, Wp, Cmid), lambda b: (b, 0, 0, 0)),
            pl.BlockSpec((cardinality, 9, cg, cg), lambda b: (0, 0, 0, 0)),
            pl.BlockSpec((1, Cmid), lambda b: (0, 0)),
            pl.BlockSpec((1, Cmid), lambda b: (0, 0)),
        ],
        out_specs=pl.BlockSpec((1, ho * wo, Cmid), lambda b: (b, 0, 0)),
        compiler_params=pltpu.CompilerParams(dimension_semantics=("parallel",)),
    )(xp, w2g, scale.reshape(1, Cmid), bias.reshape(1, Cmid))


# -----------------------------------------------------------------------------
# Kernel 3: conv3 (1x1) + folded-BN + per-batch pooled channel sums (SE squeeze)
# -----------------------------------------------------------------------------
def _conv3_bn_pool_kernel(y2_ref, w_ref, s_ref, b_ref, y3_ref, pool_ref, *,
                          hw, tile_r):
    r = pl.program_id(1)
    y = jnp.dot(y2_ref[0], w_ref[...], preferred_element_type=jnp.float32)
    y = y * s_ref[...] + b_ref[...]
    y3_ref[0] = y

    @pl.when(r == 0)
    def _init():
        pool_ref[...] = jnp.zeros_like(pool_ref)

    # Mask rows beyond HW (ragged last tile) out of the pooled sum.
    row_ids = r * tile_r + lax.broadcasted_iota(jnp.int32, (tile_r, 1), 0)
    pool_ref[0] += jnp.sum(jnp.where(row_ids < hw, y, 0.0), axis=0, keepdims=True)


def conv3_bn_pool(y2, w3, scale, bias, *, tile_rows=256):
    """y2: (B, HW, Cmid) bf16 -> y3: (B, HW, Cout) f32, pooled sums: (B, 1, Cout) f32."""
    B, HW, Cmid = y2.shape
    Cout = w3.shape[1]
    tile = min(tile_rows, HW)
    kernel = functools.partial(_conv3_bn_pool_kernel, hw=HW, tile_r=tile)
    return pl.pallas_call(
        kernel,
        out_shape=(jax.ShapeDtypeStruct((B, HW, Cout), jnp.float32),
                   jax.ShapeDtypeStruct((B, 1, Cout), jnp.float32)),
        grid=(B, pl.cdiv(HW, tile)),
        in_specs=[
            pl.BlockSpec((1, tile, Cmid), lambda b, r: (b, r, 0)),
            pl.BlockSpec((Cmid, Cout), lambda b, r: (0, 0)),
            pl.BlockSpec((1, Cout), lambda b, r: (0, 0)),
            pl.BlockSpec((1, Cout), lambda b, r: (0, 0)),
        ],
        out_specs=(pl.BlockSpec((1, tile, Cout), lambda b, r: (b, r, 0)),
                   pl.BlockSpec((1, 1, Cout), lambda b, r: (b, 0, 0))),
        compiler_params=pltpu.CompilerParams(
            dimension_semantics=("parallel", "arbitrary")),
    )(y2, w3, scale.reshape(1, Cout), bias.reshape(1, Cout))


# -----------------------------------------------------------------------------
# Kernel 4: SE excite + sidepath 1x1 conv + BN + channel scale + residual + ReLU
# -----------------------------------------------------------------------------
def _se_side_residual_kernel(y3_ref, xs_ref, pool_ref, w1_ref, b1_ref, w2_ref,
                             b2_ref, ws_ref, ss_ref, bs_ref, o_ref, *, inv_hw):
    # SE FCs recomputed per row tile: negligible FLOPs, avoids another pallas_call
    # and a coef HBM round-trip.
    pooled = pool_ref[0] * inv_hw                                      # (1, Cout)
    h = jnp.dot(pooled, w1_ref[...], preferred_element_type=jnp.float32) + b1_ref[...]
    h = jnp.maximum(h, 0.0)
    logits = jnp.dot(h, w2_ref[...], preferred_element_type=jnp.float32) + b2_ref[...]
    coef = jax.nn.sigmoid(logits)                                      # (1, Cout)
    # sidepath 1x1 conv + folded BN, computed in-tile (never written to HBM)
    side = jnp.dot(xs_ref[0], ws_ref[...], preferred_element_type=jnp.float32)
    side = side * ss_ref[...] + bs_ref[...]
    out = y3_ref[0] * coef + side
    o_ref[0] = jnp.maximum(out, 0.0).astype(o_ref.dtype)


def se_side_residual(y3, xs, pooled, se_w1, se_b1, se_w2, se_b2, ws, ss, bs, *,
                     tile_rows=256):
    B, HW, Cout = y3.shape
    Cin = xs.shape[-1]
    hidden = se_w1.shape[1]
    tile = min(tile_rows, HW)
    kernel = functools.partial(_se_side_residual_kernel, inv_hw=1.0 / HW)
    return pl.pallas_call(
        kernel,
        out_shape=jax.ShapeDtypeStruct((B, HW, Cout), jnp.float32),
        grid=(B, pl.cdiv(HW, tile)),
        in_specs=[
            pl.BlockSpec((1, tile, Cout), lambda b, r: (b, r, 0)),
            pl.BlockSpec((1, tile, Cin), lambda b, r: (b, r, 0)),
            pl.BlockSpec((1, 1, Cout), lambda b, r: (b, 0, 0)),
            pl.BlockSpec((Cout, hidden), lambda b, r: (0, 0)),
            pl.BlockSpec((1, hidden), lambda b, r: (0, 0)),
            pl.BlockSpec((hidden, Cout), lambda b, r: (0, 0)),
            pl.BlockSpec((1, Cout), lambda b, r: (0, 0)),
            pl.BlockSpec((Cin, Cout), lambda b, r: (0, 0)),
            pl.BlockSpec((1, Cout), lambda b, r: (0, 0)),
            pl.BlockSpec((1, Cout), lambda b, r: (0, 0)),
        ],
        out_specs=pl.BlockSpec((1, tile, Cout), lambda b, r: (b, r, 0)),
        compiler_params=pltpu.CompilerParams(
            dimension_semantics=("parallel", "parallel")),
    )(y3, xs, pooled, se_w1, se_b1.reshape(1, hidden), se_w2,
      se_b2.reshape(1, Cout), ws, ss.reshape(1, Cout), bs.reshape(1, Cout))


# -----------------------------------------------------------------------------
# ResNeXtBlock forward (wrapper: layout glue in JAX, hot paths in Pallas)
# -----------------------------------------------------------------------------
def fold_bn(gamma, beta, mean, var):
    scale = gamma / jnp.sqrt(var + BN_EPS)
    bias = beta - mean * scale
    return scale, bias


def resnext_block_forward(x_nchw, p, cardinality, stride):
    B, Cin, H, W = x_nchw.shape
    Cmid = p["w2_pt"].shape[0]                   # cardinality * group
    Cg = Cmid // cardinality
    Cout = 2 * Cmid
    Ho = (H + 2 - 3) // stride + 1
    Wo = (W + 2 - 3) // stride + 1

    # NCHW -> NHWC, bf16 for matmul inputs.
    xh = jnp.transpose(x_nchw, (0, 2, 3, 1)).astype(jnp.bfloat16)

    # --- conv1 (1x1) + bn1 + relu --------------------------------------------
    s1, b1 = fold_bn(*p["bn1"])
    w1 = p["w1_pt"][:, :, 0, 0].T.astype(jnp.bfloat16)                 # (Cin, Cmid)
    y1 = matmul_bn_act(xh.reshape(B * H * W, Cin), w1, s1, b1,
                       relu=True, out_dtype=jnp.bfloat16)
    y1p = jnp.pad(y1.reshape(B, H, W, Cmid), ((0, 0), (1, 1), (1, 1), (0, 0)))

    # --- conv2 (3x3 grouped, stride) + bn2 + relu (fused, per-group matmuls) --
    s2, b2 = fold_bn(*p["bn2"])
    w2g = jnp.transpose(p["w2_pt"].reshape(cardinality, Cg, Cg, 3, 3),
                        (0, 3, 4, 2, 1)).reshape(cardinality, 9, Cg, Cg)
    y2 = grouped_conv3x3_bn_relu(y1p, w2g.astype(jnp.bfloat16), s2, b2,
                                 cardinality=cardinality, cg=Cg, ho=Ho, wo=Wo,
                                 stride=stride, out_dtype=jnp.bfloat16)

    # --- conv3 (1x1) + bn3 + SE squeeze (pooled channel sums), one pass -------
    s3, b3 = fold_bn(*p["bn3"])
    w3 = p["w3_pt"][:, :, 0, 0].T.astype(jnp.bfloat16)                 # (Cmid, Cout)
    y3, pooled = conv3_bn_pool(y2, w3, s3, b3)

    # --- shortcut rows (strided subsample only needed when stride > 1) --------
    xs = xh if stride == 1 else xh[:, ::stride, ::stride, :]
    xs = xs.reshape(B, Ho * Wo, Cin)

    # --- SE excite + side 1x1 conv + bn + scale + residual + relu (fused) -----
    ss, bs = fold_bn(*p["bn_side"])
    ws = p["ws_pt"][:, :, 0, 0].T.astype(jnp.bfloat16)                 # (Cin, Cout)
    out = se_side_residual(y3, xs, pooled, p["se_w1"], p["se_b1"],
                           p["se_w2"], p["se_b2"], ws, ss, bs)

    out = out.reshape(B, Ho, Wo, Cout)
    return jnp.transpose(out, (0, 3, 1, 2))                            # back to NCHW


# -----------------------------------------------------------------------------
# Pure-JAX reference (NCHW, mirrors the PyTorch graph) for correctness checking
# -----------------------------------------------------------------------------
def ref_forward(x, p, cardinality, stride):
    def bn(t, params):
        g, b, m, v = params
        inv = g / jnp.sqrt(v + BN_EPS)
        return t * inv[None, :, None, None] + (b - m * inv)[None, :, None, None]

    def conv(t, w, s, pad, groups=1):
        return lax.conv_general_dilated(
            t, w, (s, s), [(pad, pad), (pad, pad)],
            dimension_numbers=("NCHW", "OIHW", "NCHW"),
            feature_group_count=groups,
            precision=lax.Precision.HIGHEST,
        )

    relu = lambda t: jnp.maximum(t, 0.0)
    shortcut = x
    h = relu(bn(conv(x, p["w1_pt"], 1, 0), p["bn1"]))
    h = relu(bn(conv(h, p["w2_pt"], stride, 1, groups=cardinality), p["bn2"]))
    h = bn(conv(h, p["w3_pt"], 1, 0), p["bn3"])
    pooled = h.mean(axis=(2, 3))                                       # (B, Cout)
    z = relu(jnp.dot(pooled, p["se_w1"], precision=lax.Precision.HIGHEST) + p["se_b1"])
    coef = jax.nn.sigmoid(jnp.dot(z, p["se_w2"], precision=lax.Precision.HIGHEST) + p["se_b2"])
    h = h * coef[:, :, None, None]
    side = bn(conv(shortcut, p["ws_pt"], stride, 0), p["bn_side"])
    return relu(h + side)


# -----------------------------------------------------------------------------
if __name__ == "__main__":
    B, Cin, H, W = 2, 64, 16, 16
    cardinality, group, stride = 8, 16, 1
    Cmid = cardinality * group                  # 128
    Cout = 2 * Cmid                             # 256
    hidden = Cout // 16                         # 16 (SE reduction = 16)

    key = random.PRNGKey(0)
    ks = random.split(key, 13)

    def bn_params(k, c):
        k1, k2, k3, k4 = random.split(k, 4)
        gamma = random.uniform(k1, (c,), jnp.float32, 0.5, 1.5)
        beta = 0.1 * random.normal(k2, (c,), jnp.float32)
        mean = 0.1 * random.normal(k3, (c,), jnp.float32)
        var = random.uniform(k4, (c,), jnp.float32, 0.5, 1.5)
        return (gamma, beta, mean, var)

    params = {
        "w1_pt": 0.1 * random.normal(ks[0], (Cmid, Cin, 1, 1), jnp.float32),
        "w2_pt": 0.1 * random.normal(ks[1], (Cmid, Cmid // cardinality, 3, 3), jnp.float32),
        "w3_pt": 0.1 * random.normal(ks[2], (Cout, Cmid, 1, 1), jnp.float32),
        "ws_pt": 0.1 * random.normal(ks[3], (Cout, Cin, 1, 1), jnp.float32),
        "bn1": bn_params(ks[4], Cmid),
        "bn2": bn_params(ks[5], Cmid),
        "bn3": bn_params(ks[6], Cout),
        "bn_side": bn_params(ks[7], Cout),
        "se_w1": 0.1 * random.normal(ks[8], (Cout, hidden), jnp.float32),
        "se_b1": 0.1 * random.normal(ks[9], (hidden,), jnp.float32),
        "se_w2": 0.1 * random.normal(ks[10], (hidden, Cout), jnp.float32),
        "se_b2": 0.1 * random.normal(ks[11], (Cout,), jnp.float32),
    }

    x = random.normal(ks[12], (B, Cin, H, W), jnp.float32)

    out = jax.block_until_ready(resnext_block_forward(x, params, cardinality, stride))
    ref = jax.block_until_ready(ref_forward(x, params, cardinality, stride))

    # bf16 MXU inputs vs f32 reference -> loosened tolerance.
    np.testing.assert_allclose(np.asarray(out), np.asarray(ref), rtol=3e-2, atol=3e-2)

    print("KERNEL_OK")
</pallas_src>

<mosaic_0001>
module attributes {stable_mosaic.version = 11 : i64} {
  func.func @_matmul_bn_act_kernel(%arg0: i32, %arg1: memref<256x64xbf16, #tpu.memory_space<vmem>>, %arg2: memref<64x128xbf16, #tpu.memory_space<vmem>>, %arg3: memref<1x128xf32, #tpu.memory_space<vmem>>, %arg4: memref<1x128xf32, #tpu.memory_space<vmem>>, %arg5: memref<256x128xbf16, #tpu.memory_space<vmem>>) attributes {dimension_semantics = [#tpu.dimension_semantics<parallel>], iteration_bounds = array<i64: 2>, scalar_prefetch = 0 : i64, scratch_operands = 0 : i64, tpu.core_type = #tpu.core_type<tc>, window_params = [{transform_indices = @transform_0, window_bounds = array<i64: 256, 64>}, {pipeline_mode = #tpu.pipeline_mode<synchronous>, transform_indices = @transform_1, window_bounds = array<i64: 64, 128>}, {pipeline_mode = #tpu.pipeline_mode<synchronous>, transform_indices = @transform_2, window_bounds = array<i64: 1, 128>}, {pipeline_mode = #tpu.pipeline_mode<synchronous>, transform_indices = @transform_3, window_bounds = array<i64: 1, 128>}, {transform_indices = @transform_4, window_bounds = array<i64: 256, 128>}]} {
    %c0 = arith.constant 0 : index
    %c0_0 = arith.constant 0 : index
    %0 = vector.load %arg1[%c0, %c0_0] : memref<256x64xbf16, #tpu.memory_space<vmem>>, vector<256x64xbf16>
    %c0_1 = arith.constant 0 : index
    %c0_2 = arith.constant 0 : index
    %1 = vector.load %arg2[%c0_1, %c0_2] : memref<64x128xbf16, #tpu.memory_space<vmem>>, vector<64x128xbf16>
    %cst = arith.constant dense<0.000000e+00> : vector<256x128xf32>
    %2 = tpu.matmul %0, %1, %cst {dimension_numbers = #tpu.dot_dimension_numbers<[1], [0], [0], [1], [0, 0, 1, 1], [], []>} : vector<256x64xbf16>, vector<64x128xbf16>, vector<256x128xf32> -> vector<256x128xf32>
    %c0_3 = arith.constant 0 : index
    %c0_4 = arith.constant 0 : index
    %3 = vector.load %arg3[%c0_3, %c0_4] : memref<1x128xf32, #tpu.memory_space<vmem>>, vector<1x128xf32>
    %4 = vector.broadcast %3 : vector<1x128xf32> to vector<256x128xf32>
    %5 = arith.mulf %2, %4 : vector<256x128xf32>
    %c0_5 = arith.constant 0 : index
    %c0_6 = arith.constant 0 : index
    %6 = vector.load %arg4[%c0_5, %c0_6] : memref<1x128xf32, #tpu.memory_space<vmem>>, vector<1x128xf32>
    %7 = vector.broadcast %6 : vector<1x128xf32> to vector<256x128xf32>
    %8 = arith.addf %5, %7 : vector<256x128xf32>
    %cst_7 = arith.constant 0.000000e+00 : f32
    %9 = vector.broadcast %cst_7 : f32 to vector<256x128xf32>
    %10 = arith.maximumf %8, %9 : vector<256x128xf32>
    %11 = arith.truncf %10 : vector<256x128xf32> to vector<256x128xbf16>
    %c0_8 = arith.constant 0 : index
    %c0_9 = arith.constant 0 : index
    %12 = vector.load %arg5[%c0_8, %c0_9] : memref<256x128xbf16, #tpu.memory_space<vmem>>, vector<256x128xbf16>
    tpu.vector_store %arg5[%c0_8, %c0_9], %11 {strides = array<i32>} : memref<256x128xbf16, #tpu.memory_space<vmem>>, vector<256x128xbf16>,
    return
  }
  func.func @transform_0(%arg0: i32) -> (i32, i32) {
    %c0_i32 = arith.constant 0 : i32
    %c0_i32_0 = arith.constant 0 : i32
    return %arg0, %c0_i32 : i32, i32
  }
  func.func @transform_1(%arg0: i32) -> (i32, i32) {
    %c0_i32 = arith.constant 0 : i32
    %c0_i32_0 = arith.constant 0 : i32
    %c0_i32_1 = arith.constant 0 : i32
    return %c0_i32, %c0_i32_0 : i32, i32
  }
  func.func @transform_2(%arg0: i32) -> (i32, i32) {
    %c0_i32 = arith.constant 0 : i32
    %c0_i32_0 = arith.constant 0 : i32
    %c0_i32_1 = arith.constant 0 : i32
    return %c0_i32, %c0_i32_0 : i32, i32
  }
  func.func @transform_3(%arg0: i32) -> (i32, i32) {
    %c0_i32 = arith.constant 0 : i32
    %c0_i32_0 = arith.constant 0 : i32
    %c0_i32_1 = arith.constant 0 : i32
    return %c0_i32, %c0_i32_0 : i32, i32
  }
  func.func @transform_4(%arg0: i32) -> (i32, i32) {
    %c0_i32 = arith.constant 0 : i32
    %c0_i32_0 = arith.constant 0 : i32
    return %arg0, %c0_i32 : i32, i32
  }
}

</mosaic_0001>

<llo_original>
// kernel: tpu_custom_call.1
$region0: #{tpu_custom_call.1}
  #allocation0 [shape = 'u32[]', space=smem, size = 0x4, offset = 0x4, fixed_abs, tag = 'smem constant byte address 0x4 - core index']
  #allocation1 [shape = 'u32[144,128]{1,0:T(1,128)}', space=vmem, size = 0x12000, scoped, tag = 'internal scratch']
  %s0 = inlined_call_operand.vmem [shape: bf16[512,64], index: 0, kind: input, shape index: {}]
  %s1 = inlined_call_operand.vmem [shape: bf16[64,128], index: 1, kind: input, shape index: {}]
  %s2 = inlined_call_operand.vmem [shape: f32[1,128], index: 2, kind: input, shape index: {}]
  %s3 = inlined_call_operand.vmem [shape: f32[1,128], index: 3, kind: input, shape index: {}]
  %s4 = inlined_call_operand.hbm [shape: bf16[512,128], index: 4, kind: output, shape index: {}]
  %s5 = sld [smem:[#allocation0]]
  $region49: #{tpu_custom_call.1} parent=0
    _
  %s7 = ssub.s32 1, %s5
  %s8 = scalar_select 0, %s7, %s5
  $region1: #{tpu_custom_call.1} parent=0
    #allocation2 [shape = 'u8[131072]{0}', space=vmem, size = 0x20000, scoped, tag = 'output window, operand 0']
    #allocation3 [shape = 's32[2]{0}', space=sflag, size = 0x8, scoped, tag = 'scoped memory for tpu_custom_call.1']
    %9 = vsyncpa [#allocation3], 0
    %s10 = scalar_lea.sflag [#allocation3], 1
    %11 = vsyncpa %s10, 0
    loop: start=0, step=1, limit=4
    $region2: #{tpu_custom_call.1} parent=1 // loop_pre_header
      _
    $region3: #{tpu_custom_call.1} parent=1 // loop_header
      %s13 = sphi 0, %s17
      %p14 = scmp.ge.s32.totalorder %s13, 4
      %s23 = sphi 0, %s25
      %s26 = sphi 0, %s23
      %s27 = sphi 0, %s26
      %s43 = sphi 0, %s27
      %s47 = sphi 0, %s47
      %s49 = sphi 0, %s47
      %s50 = sphi 0, %s49
      %s64 = sphi 0, %s50
      %s68 = sphi 0, %s68
      %s70 = sphi 0, %s68
      %s71 = sphi 0, %s70
      %s85 = sphi 0, %s71
      %s89 = sphi 0, %s89
      %s91 = sphi 0, %s89
      %s92 = sphi 0, %s91
      %s106 = sphi 0, %s92
      %s112 = sphi 0, %s114
      %s115 = sphi 0, %s112
      %s116 = sphi 0, %s115
      %s132 = sphi 0, %s116
    $region4: #{tpu_custom_call.1} parent=1 // loop_header_branch
      %16 = sbr.rel (%p14) target = $region8
    $region5: #{tpu_custom_call.1} parent=1 // loop_body
      %s18 = ssub.s32 %s13, 1
      %s19 = ssub.s32 %s13, 2
      %s20 = sadd.s32 %s13, 1
      %s21 = ssub.s32 %s13, %s20
      %p22 = scmp.eq.s32.totalorder %s21, 0
      %s24 = sadd.s32 %s23, 1
      %s25 = scalar_select %p22, %s23, %s24
      %p28 = pneg %p22
      %p29 = scmp.eq.s32.totalorder %s13, 1
      %p30 = por %p28, %p29
      %p31 = scmp.ne.s32.totalorder %s23, %s26
      %p32 = scmp.eq.s32.totalorder %s13, 0
      %p33 = por %p31, %p32
      %p34 = scmp.ne.s32.totalorder %s23, %s26
      %p35 = scmp.eq.s32.totalorder %s18, 1
      %p36 = por %p34, %p35
      %p37 = scmp.ne.s32.totalorder %s26, %s27
      %p38 = scmp.eq.s32.totalorder %s18, 0
      %p39 = por %p37, %p38
      %p40 = scmp.ne.s32.totalorder %s26, %s27
      %p41 = scmp.eq.s32.totalorder %s19, 1
      %p42 = por %p40, %p41
      %p44 = scmp.ne.s32.totalorder %s27, %s43
      %p45 = scmp.eq.s32.totalorder %s19, 0
      %p46 = por %p44, %p45
      %s48 = sadd.s32 %s47, 1
      %p51 = scmp.eq.s32.totalorder %s13, 1
      %p52 = scmp.ne.s32.totalorder %s47, %s49
      %p53 = scmp.eq.s32.totalorder %s13, 0
      %p54 = por %p52, %p53
      %p55 = scmp.ne.s32.totalorder %s47, %s49
      %p56 = scmp.eq.s32.totalorder %s18, 1
      %p57 = por %p55, %p56
      %p58 = scmp.ne.s32.totalorder %s49, %s50
      %p59 = scmp.eq.s32.totalorder %s18, 0
      %p60 = por %p58, %p59
      %p61 = scmp.ne.s32.totalorder %s49, %s50
      %p62 = scmp.eq.s32.totalorder %s19, 1
      %p63 = por %p61, %p62
      %p65 = scmp.ne.s32.totalorder %s50, %s64
      %p66 = scmp.eq.s32.totalorder %s19, 0
      %p67 = por %p65, %p66
      %s69 = sadd.s32 %s68, 1
      %p72 = scmp.eq.s32.totalorder %s13, 1
      %p73 = scmp.ne.s32.totalorder %s68, %s70
      %p74 = scmp.eq.s32.totalorder %s13, 0
      %p75 = por %p73, %p74
      %p76 = scmp.ne.s32.totalorder %s68, %s70
      %p77 = scmp.eq.s32.totalorder %s18, 1
      %p78 = por %p76, %p77
      %p79 = scmp.ne.s32.totalorder %s70, %s71
      %p80 = scmp.eq.s32.totalorder %s18, 0
      %p81 = por %p79, %p80
      %p82 = scmp.ne.s32.totalorder %s70, %s71
      %p83 = scmp.eq.s32.totalorder %s19, 1
      %p84 = por %p82, %p83
      %p86 = scmp.ne.s32.totalorder %s71, %s85
      %p87 = scmp.eq.s32.totalorder %s19, 0
      %p88 = por %p86, %p87
      %s90 = sadd.s32 %s89, 1
      %p93 = scmp.eq.s32.totalorder %s13, 1
      %p94 = scmp.ne.s32.totalorder %s89, %s91
      %p95 = scmp.eq.s32.totalorder %s13, 0
      %p96 = por %p94, %p95
      %p97 = scmp.ne.s32.totalorder %s89, %s91
      %p98 = scmp.eq.s32.totalorder %s18, 1
      %p99 = por %p97, %p98
      %p100 = scmp.ne.s32.totalorder %s91, %s92
      %p101 = scmp.eq.s32.totalorder %s18, 0
      %p102 = por %p100, %p101
      %p103 = scmp.ne.s32.totalorder %s91, %s92
      %p104 = scmp.eq.s32.totalorder %s19, 1
      %p105 = por %p103, %p104
      %p107 = scmp.ne.s32.totalorder %s92, %s106
      %p108 = scmp.eq.s32.totalorder %s19, 0
      %p109 = por %p107, %p108
      %s110 = ssub.s32 %s13, %s20
      %p111 = scmp.eq.s32.totalorder %s110, 0
      %s113 = sadd.s32 %s112, 1
      %s114 = scalar_select %p111, %s112, %s113
      %p117 = pneg %p111
      %p118 = scmp.eq.s32.totalorder %s13, 1
      %p119 = por %p117, %p118
      %p120 = scmp.ne.s32.totalorder %s112, %s115
      %p121 = scmp.eq.s32.totalorder %s13, 0
      %p122 = por %p120, %p121
      %p123 = scmp.ne.s32.totalorder %s112, %s115
      %p124 = scmp.eq.s32.totalorder %s18, 1
      %p125 = por %p123, %p124
      %p126 = scmp.ne.s32.totalorder %s115, %s116
      %p127 = scmp.eq.s32.totalorder %s18, 0
      %p128 = por %p126, %p127
      %p129 = scmp.ne.s32.totalorder %s115, %s116
      %p130 = scmp.eq.s32.totalorder %s19, 1
      %p131 = por %p129, %p130
      %p133 = scmp.ne.s32.totalorder %s116, %s132
      %p134 = scmp.eq.s32.totalorder %s19, 0
      %p135 = por %p133, %p134
      %p136 = scmp.le.s32.totalorder 1, %s13
      %p137 = scmp.lt.s32.totalorder %s13, 3
      %p138 = pnand %p136, %p137
      %p139 = pneg %p138
      // Predicated region
      $region9: #{tpu_custom_call.1} parent=5 // pred_check
        _
      $region10: #{tpu_custom_call.1} parent=5 // pred_check_branch
        %141 = sbr.rel (%p138) target = $region12
      $region11: #{tpu_custom_call.1} parent=5 // pred_region
        %s142 = ssub.s32 %s13, 1
        // Predicated region
        $region13: #{tpu_custom_call.1} parent=11 // pred_check
          %p143 = pneg %p60
        $region14: #{tpu_custom_call.1} parent=11 // pred_check_branch
          %145 = sbr.rel (%p143) target = $region16
        $region15: #{tpu_custom_call.1} parent=11 // pred_region
          _
        $region16: #{tpu_custom_call.1} parent=11 // pred_fallthru
          _
        // Predicated region
        $region17: #{tpu_custom_call.1} parent=11 // pred_check
          %p146 = pneg %p81
        $region18: #{tpu_custom_call.1} parent=11 // pred_check_branch
          %148 = sbr.rel (%p146) target = $region20
        $region19: #{tpu_custom_call.1} parent=11 // pred_region
          _
        $region20: #{tpu_custom_call.1} parent=11 // pred_fallthru
          _
        // Predicated region
        $region21: #{tpu_custom_call.1} parent=11 // pred_check
          %p149 = pneg %p102
        $region22: #{tpu_custom_call.1} parent=11 // pred_check_branch
          %151 = sbr.rel (%p149) target = $region24
        $region23: #{tpu_custom_call.1} parent=11 // pred_region
          _
        $region24: #{tpu_custom_call.1} parent=11 // pred_fallthru
          _
      $region12: #{tpu_custom_call.1} parent=5 // pred_fallthru
        _
      %p152 = scmp.lt.s32.totalorder %s13, 2
      // Predicated region
      $region25: #{tpu_custom_call.1} parent=5 // pred_check
        %p153 = pneg %p152
      $region26: #{tpu_custom_call.1} parent=5 // pred_check_branch
        %155 = sbr.rel (%p153) target = $region28
      $region27: #{tpu_custom_call.1} parent=5 // pred_region
        // Predicated region
        $region29: #{tpu_custom_call.1} parent=27 // pred_check
          %p156 = pneg %p33
        $region30: #{tpu_custom_call.1} parent=27 // pred_check_branch
          %158 = sbr.rel (%p156) target = $region32
        $region31: #{tpu_custom_call.1} parent=27 // pred_region
          %s159 = smul.u32 32, %s13
          %p160 = scmp.lt.s32.totalorder %s159, 63
          %s161 = scalar_select %p160, %s159, 63
          %s162 = smul.addr %s161, 4
          %s163 = scalar_lea.vmem %s0, %s162
          %s164 = smul.u32 32, %s13
        $region32: #{tpu_custom_call.1} parent=27 // pred_fallthru
          _
      $region28: #{tpu_custom_call.1} parent=5 // pred_fallthru
        _
      %p165 = scmp.le.s32.totalorder 1, %s13
      %p166 = scmp.lt.s32.totalorder %s13, 3
      %p167 = pnand %p165, %p166
      %p168 = pneg %p167
      // Predicated region
      $region33: #{tpu_custom_call.1} parent=5 // pred_check
        _
      $region34: #{tpu_custom_call.1} parent=5 // pred_check_branch
        %170 = sbr.rel (%p167) target = $region36
      $region35: #{tpu_custom_call.1} parent=5 // pred_region
        %s171 = ssub.s32 %s13, 1
        %s172 = smul.u32 32, %s18
        %p173 = scmp.lt.s32.totalorder %s172, 63
        %s174 = scalar_select %p173, %s172, 63
        %s175 = smul.addr %s174, 4
        %s176 = scalar_lea.vmem %s0, %s175
        %p177 = pneg %p39
        %p178 = pneg %p36
        %p179 = pneg %p60
        %p180 = pneg %p57
        %p181 = pneg %p81
        %p182 = pneg %p78
        %p183 = pneg %p102
        %p184 = pneg %p99
        %p185 = pneg %p128
        %p186 = pneg %p125
        %s187 = sand.u32 %s115, 1
        %s188 = scalar_lea.sflag [#allocation3], %s187
        %s189 = sand.u32 %s115, 1
        %s190 = smul.addr %s189, 128
        %s191 = scalar_lea.vmem [#allocation2], %s190
        %s192 = smul.u32 32, %s18
        %p193 = scmp.lt.s32.totalorder %s192, 63
        %s194 = scalar_select %p193, %s192, 63
        %s195 = smul.addr %s194, 4
        %s196 = scalar_lea.vmem %s0, %s195
        %s197 = smul.u32 32, %s18
        %s198 = smul.u32 32, %s18
        %v200 = vld [vmem:[%s196] sm:$0xf]
        %v201 = vld [vmem:[%s196 + $0x4] sm:$0xf]
        %v202 = vld [vmem:[%s196 + $0x8] sm:$0xf]
        %v203 = vld [vmem:[%s196 + $0xc] sm:$0xf]
        %v204 = vld [vmem:[%s196 + $0x10] sm:$0xf]
        %v205 = vld [vmem:[%s196 + $0x14] sm:$0xf]
        %v206 = vld [vmem:[%s196 + $0x18] sm:$0xf]
        %v207 = vld [vmem:[%s196 + $0x1c] sm:$0xf]
        %v208 = vld [vmem:[%s196 + $0x20] sm:$0xf]
        %v209 = vld [vmem:[%s196 + $0x24] sm:$0xf]
        %v210 = vld [vmem:[%s196 + $0x28] sm:$0xf]
        %v211 = vld [vmem:[%s196 + $0x2c] sm:$0xf]
        %v212 = vld [vmem:[%s196 + $0x30] sm:$0xf]
        %v213 = vld [vmem:[%s196 + $0x34] sm:$0xf]
        %v214 = vld [vmem:[%s196 + $0x38] sm:$0xf]
        %v215 = vld [vmem:[%s196 + $0x3c] sm:$0xf]
        %v216 = vld [vmem:[%s196 + $0x40] sm:$0xf]
        %v217 = vld [vmem:[%s196 + $0x44] sm:$0xf]
        %v218 = vld [vmem:[%s196 + $0x48] sm:$0xf]
        %v219 = vld [vmem:[%s196 + $0x4c] sm:$0xf]
        %v220 = vld [vmem:[%s196 + $0x50] sm:$0xf]
        %v221 = vld [vmem:[%s196 + $0x54] sm:$0xf]
        %v222 = vld [vmem:[%s196 + $0x58] sm:$0xf]
        %v223 = vld [vmem:[%s196 + $0x5c] sm:$0xf]
        %v224 = vld [vmem:[%s196 + $0x60] sm:$0xf]
        %v225 = vld [vmem:[%s196 + $0x64] sm:$0xf]
        %v226 = vld [vmem:[%s196 + $0x68] sm:$0xf]
        %v227 = vld [vmem:[%s196 + $0x6c] sm:$0xf]
        %v228 = vld [vmem:[%s196 + $0x70] sm:$0xf]
        %v229 = vld [vmem:[%s196 + $0x74] sm:$0xf]
        %v230 = vld [vmem:[%s196 + $0x78] sm:$0xf]
        %v231 = vld [vmem:[%s196 + $0x7c] sm:$0xf]
        %v232 = vld [vmem:[%s1] sm:$0xf]
        %v233 = vld [vmem:[%s1 + $0x4] sm:$0xf]
        %v234 = vld [vmem:[%s1 + $0x8] sm:$0xf]
        %v235 = vld [vmem:[%s1 + $0xc] sm:$0xf]
        %v236 = vld [vmem:[%s1 + $0x10] sm:$0xf]
        %v237 = vld [vmem:[%s1 + $0x14] sm:$0xf]
        %v238 = vld [vmem:[%s1 + $0x18] sm:$0xf]
        %v239 = vld [vmem:[%s1 + $0x1c] sm:$0xf]
        %v272 = vunpack.c.l.b16 %v200
        %v273 = vunpack.c.l.b16 %v201
        %v274 = vunpack.c.l.b16 %v202
        %v275 = vunpack.c.l.b16 %v203
        %v276 = vunpack.c.l.b16 %v204
        %v277 = vunpack.c.l.b16 %v205
        %v278 = vunpack.c.l.b16 %v206
        %v279 = vunpack.c.l.b16 %v207
        %v280 = vunpack.c.l.b16 %v208
        %v281 = vunpack.c.l.b16 %v209
        %v282 = vunpack.c.l.b16 %v210
        %v283 = vunpack.c.l.b16 %v211
        %v284 = vunpack.c.l.b16 %v212
        %v285 = vunpack.c.l.b16 %v213
        %v286 = vunpack.c.l.b16 %v214
        %v287 = vunpack.c.l.b16 %v215
        %v288 = vunpack.c.l.b16 %v216
        %v289 = vunpack.c.l.b16 %v217
        %v290 = vunpack.c.l.b16 %v218
        %v291 = vunpack.c.l.b16 %v219
        %v292 = vunpack.c.l.b16 %v220
        %v293 = vunpack.c.l.b16 %v221
        %v294 = vunpack.c.l.b16 %v222
        %v295 = vunpack.c.l.b16 %v223
        %v296 = vunpack.c.l.b16 %v224
        %v297 = vunpack.c.l.b16 %v225
        %v298 = vunpack.c.l.b16 %v226
        %v299 = vunpack.c.l.b16 %v227
        %v300 = vunpack.c.l.b16 %v228
        %v301 = vunpack.c.l.b16 %v229
        %v302 = vunpack.c.l.b16 %v230
        %v303 = vunpack.c.l.b16 %v231
        %v304 = vpack.c.b16 %v273, %v272
        %v305 = vpack.c.b16 %v275, %v274
        %v306 = vpack.c.b16 %v277, %v276
        %v307 = vpack.c.b16 %v279, %v278
        %v308 = vpack.c.b16 %v281, %v280
        %v309 = vpack.c.b16 %v283, %v282
        %v310 = vpack.c.b16 %v285, %v284
        %v311 = vpack.c.b16 %v287, %v286
        %v312 = vpack.c.b16 %v289, %v288
        %v313 = vpack.c.b16 %v291, %v290
        %v314 = vpack.c.b16 %v293, %v292
        %v315 = vpack.c.b16 %v295, %v294
        %v316 = vpack.c.b16 %v297, %v296
        %v317 = vpack.c.b16 %v299, %v298
        %v318 = vpack.c.b16 %v301, %v300
        %v319 = vpack.c.b16 %v303, %v302
        %v328 = vunpack.c.l.b16 %v232
        %v329 = vunpack.c.l.b16 %v233
        %v330 = vunpack.c.l.b16 %v234
        %v331 = vunpack.c.l.b16 %v235
        %v332 = vunpack.c.l.b16 %v236
        %v333 = vunpack.c.l.b16 %v237
        %v334 = vunpack.c.l.b16 %v238
        %v335 = vunpack.c.l.b16 %v239
        %v336 = vpack.c.b16 %v329, %v328
        %v337 = vpack.c.b16 %v331, %v330
        %v338 = vpack.c.b16 %v333, %v332
        %v339 = vpack.c.b16 %v335, %v334
        %vm344 = vcmask 523264
        %v346 = vsel %vm344, %v304, 0
        %v349 = vsel %vm344, %v305, 0
        %v352 = vsel %vm344, %v306, 0
        %v355 = vsel %vm344, %v307, 0
        %v358 = vsel %vm344, %v308, 0
        %v361 = vsel %vm344, %v309, 0
        %v364 = vsel %vm344, %v310, 0
        %v367 = vsel %vm344, %v311, 0
        %v370 = vsel %vm344, %v312, 0
        %v373 = vsel %vm344, %v313, 0
        %v376 = vsel %vm344, %v314, 0
        %v379 = vsel %vm344, %v315, 0
        %v382 = vsel %vm344, %v316, 0
        %v385 = vsel %vm344, %v317, 0
        %v388 = vsel %vm344, %v318, 0
        %v391 = vsel %vm344, %v319, 0
        %393 = vmatprep.subr.bf16.mxu0 0
        %394 = vmatpush1.bf16.msra.mxu0 %v336
        %395 = vmatprep.subr.bf16.mxu0 0
        %396 = vmatpush1.bf16.msra.mxu0 %v337
        %397 = vmatprep.subr.bf16.mxu0 0
        %398 = vmatpush1.bf16.msra.mxu0 %v338
        %399 = vmatprep.subr.bf16.mxu0 0
        %400 = vmatpush1.bf16.msra.mxu0 %v339
        %401 = vmatprep.subr.bf16.mxu0 0
        %402 = vmatpush1.bf16.msra.mxu0 0
        %403 = vmatprep.subr.bf16.mxu0 0
        %404 = vmatpush1.bf16.msra.mxu0 0
        %405 = vmatprep.subr.bf16.mxu0 0
        %406 = vmatpush1.bf16.msra.mxu0 0
        %407 = vmatprep.subr.bf16.mxu0 0
        %408 = vmatpush1.bf16.msra.mxu0 0
        %409 = vmatprep.subr.bf16.mxu0 0
        %410 = vmatpush1.bf16.msra.mxu0 0
        %411 = vmatprep.subr.bf16.mxu0 0
        %412 = vmatpush1.bf16.msra.mxu0 0
        %413 = vmatprep.subr.bf16.mxu0 0
        %414 = vmatpush1.bf16.msra.mxu0 0
        %415 = vmatprep.subr.bf16.mxu0 0
        %416 = vmatpush1.bf16.msra.mxu0 0
        %417 = vmatprep.subr.bf16.mxu0 0
        %418 = vmatpush1.bf16.msra.mxu0 0
        %419 = vmatprep.subr.bf16.mxu0 0
        %420 = vmatpush1.bf16.msra.mxu0 0
        %421 = vmatprep.subr.bf16.mxu0 0
        %422 = vmatpush1.bf16.msra.mxu0 0
        %423 = vmatprep.subr.bf16.mxu0 0
        %424 = vmatpush1.bf16.msra.mxu0 0
        %425 = vmatprep.mubr.bf16.mxu0 0
        %426 = vmatmul.mubr.bf16.gmra.mrb[0].mxu0 %v346
        %v427 = vpop.f32.mrb[0].mxu0
        %v428 = vadd.f32 0.0, %v427
        %v429 = vpop.f32.mrb[0].mxu0
        %v430 = vpop.f32.mrb[0].mxu0
        %v431 = vadd.f32 0.0, %v430
        %v432 = vpop.f32.mrb[0].mxu0
        %433 = vmatprep.mubr.bf16.mxu0 0
        %434 = vmatmul.mubr.bf16.gmra.mrb[0].mxu0 %v349
        %v435 = vpop.f32.mrb[0].mxu0
        %v436 = vadd.f32 0.0, %v435
        %v437 = vpop.f32.mrb[0].mxu0
        %v438 = vpop.f32.mrb[0].mxu0
        %v439 = vadd.f32 0.0, %v438
        %v440 = vpop.f32.mrb[0].mxu0
        %441 = vmatprep.mubr.bf16.mxu0 0
        %442 = vmatmul.mubr.bf16.gmra.mrb[0].mxu0 %v352
        %v443 = vpop.f32.mrb[0].mxu0
        %v444 = vadd.f32 0.0, %v443
        %v445 = vpop.f32.mrb[0].mxu0
        %v446 = vpop.f32.mrb[0].mxu0
        %v447 = vadd.f32 0.0, %v446
        %v448 = vpop.f32.mrb[0].mxu0
        %449 = vmatprep.mubr.bf16.mxu0 0
        %450 = vmatmul.mubr.bf16.gmra.mrb[0].mxu0 %v355
        %v451 = vpop.f32.mrb[0].mxu0
        %v452 = vadd.f32 0.0, %v451
        %v453 = vpop.f32.mrb[0].mxu0
        %v454 = vpop.f32.mrb[0].mxu0
        %v455 = vadd.f32 0.0, %v454
        %v456 = vpop.f32.mrb[0].mxu0
        %457 = vmatprep.mubr.bf16.mxu0 0
        %458 = vmatmul.mubr.bf16.gmra.mrb[0].mxu0 %v358
        %v459 = vpop.f32.mrb[0].mxu0
        %v460 = vadd.f32 0.0, %v459
        %v461 = vpop.f32.mrb[0].mxu0
        %v462 = vpop.f32.mrb[0].mxu0
        %v463 = vadd.f32 0.0, %v462
        %v464 = vpop.f32.mrb[0].mxu0
        %465 = vmatprep.mubr.bf16.mxu0 0
        %466 = vmatmul.mubr.bf16.gmra.mrb[0].mxu0 %v361
        %v467 = vpop.f32.mrb[0].mxu0
        %v468 = vadd.f32 0.0, %v467
        %v469 = vpop.f32.mrb[0].mxu0
        %v470 = vpop.f32.mrb[0].mxu0
        %v471 = vadd.f32 0.0, %v470
        %v472 = vpop.f32.mrb[0].mxu0
        %473 = vmatprep.mubr.bf16.mxu0 0
        %474 = vmatmul.mubr.bf16.gmra.mrb[0].mxu0 %v364
        %v475 = vpop.f32.mrb[0].mxu0
        %v476 = vadd.f32 0.0, %v475
        %v477 = vpop.f32.mrb[0].mxu0
        %v478 = vpop.f32.mrb[0].mxu0
        %v479 = vadd.f32 0.0, %v478
        %v480 = vpop.f32.mrb[0].mxu0
        %481 = vmatprep.mubr.bf16.mxu0 0
        %482 = vmatmul.mubr.bf16.gmra.mrb[0].mxu0 %v367
        %v483 = vpop.f32.mrb[0].mxu0
        %v484 = vadd.f32 0.0, %v483
        %v485 = vpop.f32.mrb[0].mxu0
        %v486 = vpop.f32.mrb[0].mxu0
        %v487 = vadd.f32 0.0, %v486
        %v488 = vpop.f32.mrb[0].mxu0
        %489 = vmatprep.mubr.bf16.mxu0 0
        %490 = vmatmul.mubr.bf16.gmra.mrb[0].mxu0 %v370
        %v491 = vpop.f32.mrb[0].mxu0
        %v492 = vadd.f32 0.0, %v491
        %v493 = vpop.f32.mrb[0].mxu0
        %v494 = vpop.f32.mrb[0].mxu0
        %v495 = vadd.f32 0.0, %v494
        %v496 = vpop.f32.mrb[0].mxu0
        %497 = vmatprep.mubr.bf16.mxu0 0
        %498 = vmatmul.mubr.bf16.gmra.mrb[0].mxu0 %v373
        %v499 = vpop.f32.mrb[0].mxu0
        %v500 = vadd.f32 0.0, %v499
        %v501 = vpop.f32.mrb[0].mxu0
        %v502 = vpop.f32.mrb[0].mxu0
        %v503 = vadd.f32 0.0, %v502
        %v504 = vpop.f32.mrb[0].mxu0
        %505 = vmatprep.mubr.bf16.mxu0 0
        %506 = vmatmul.mubr.bf16.gmra.mrb[0].mxu0 %v376
        %v507 = vpop.f32.mrb[0].mxu0
        %v508 = vadd.f32 0.0, %v507
        %v509 = vpop.f32.mrb[0].mxu0
        %v510 = vpop.f32.mrb[0].mxu0
        %v511 = vadd.f32 0.0, %v510
        %v512 = vpop.f32.mrb[0].mxu0
        %513 = vmatprep.mubr.bf16.mxu0 0
        %514 = vmatmul.mubr.bf16.gmra.mrb[0].mxu0 %v379
        %v515 = vpop.f32.mrb[0].mxu0
        %v516 = vadd.f32 0.0, %v515
        %v517 = vpop.f32.mrb[0].mxu0
        %v518 = vpop.f32.mrb[0].mxu0
        %v519 = vadd.f32 0.0, %v518
        %v520 = vpop.f32.mrb[0].mxu0
        %521 = vmatprep.mubr.bf16.mxu0 0
        %522 = vmatmul.mubr.bf16.gmra.mrb[0].mxu0 %v382
        %v523 = vpop.f32.mrb[0].mxu0
        %v524 = vadd.f32 0.0, %v523
        %v525 = vpop.f32.mrb[0].mxu0
        %v526 = vpop.f32.mrb[0].mxu0
        %v527 = vadd.f32 0.0, %v526
        %v528 = vpop.f32.mrb[0].mxu0
        %529 = vmatprep.mubr.bf16.mxu0 0
        %530 = vmatmul.mubr.bf16.gmra.mrb[0].mxu0 %v385
        %v531 = vpop.f32.mrb[0].mxu0
        %v532 = vadd.f32 0.0, %v531
        %v533 = vpop.f32.mrb[0].mxu0
        %v534 = vpop.f32.mrb[0].mxu0
        %v535 = vadd.f32 0.0, %v534
        %v536 = vpop.f32.mrb[0].mxu0
        %537 = vmatprep.mubr.bf16.mxu0 0
        %538 = vmatmul.mubr.bf16.gmra.mrb[0].mxu0 %v388
        %v539 = vpop.f32.mrb[0].mxu0
        %v540 = vadd.f32 0.0, %v539
        %v541 = vpop.f32.mrb[0].mxu0
        %v542 = vpop.f32.mrb[0].mxu0
        %v543 = vadd.f32 0.0, %v542
        %v544 = vpop.f32.mrb[0].mxu0
        %545 = vmatprep.mubr.bf16.mxu0 0
        %546 = vmatmul.mubr.bf16.gmra.mrb[0].mxu0 %v391
        %v547 = vpop.f32.mrb[0].mxu0
        %v548 = vadd.f32 0.0, %v547
        %v549 = vpop.f32.mrb[0].mxu0
        %v550 = vpop.f32.mrb[0].mxu0
        %v551 = vadd.f32 0.0, %v550
        %v552 = vpop.f32.mrb[0].mxu0
        %553 = vdwg.mxu0
        %v554 = vld [vmem:[%s2] sm:$0x1]
        %v556 = vlaneseq
        %v557 = vshrl.u32 %v556, 7
        %v558 = vsub.s32 0, %v557
        %v559 = vrot.slane %v554, %v558
        %v561 = vmul.f32 %v428, %v559
        %v562 = vmul.f32 %v431, %v559
        %v563 = vmul.f32 %v436, %v559
        %v564 = vmul.f32 %v439, %v559
        %v565 = vmul.f32 %v444, %v559
        %v566 = vmul.f32 %v447, %v559
        %v567 = vmul.f32 %v452, %v559
        %v568 = vmul.f32 %v455, %v559
        %v569 = vmul.f32 %v460, %v559
        %v570 = vmul.f32 %v463, %v559
        %v571 = vmul.f32 %v468, %v559
        %v572 = vmul.f32 %v471, %v559
        %v573 = vmul.f32 %v476, %v559
        %v574 = vmul.f32 %v479, %v559
        %v575 = vmul.f32 %v484, %v559
        %v576 = vmul.f32 %v487, %v559
        %v577 = vmul.f32 %v492, %v559
        %v578 = vmul.f32 %v495, %v559
        %v579 = vmul.f32 %v500, %v559
        %v580 = vmul.f32 %v503, %v559
        %v581 = vmul.f32 %v508, %v559
        %v582 = vmul.f32 %v511, %v559
        %v583 = vmul.f32 %v516, %v559
        %v584 = vmul.f32 %v519, %v559
        %v585 = vmul.f32 %v524, %v559
        %v586 = vmul.f32 %v527, %v559
        %v587 = vmul.f32 %v532, %v559
        %v588 = vmul.f32 %v535, %v559
        %v589 = vmul.f32 %v540, %v559
        %v590 = vmul.f32 %v543, %v559
        %v591 = vmul.f32 %v548, %v559
        %v592 = vmul.f32 %v551, %v559
        %v593 = vld [vmem:[%s3] sm:$0x1]
        %v595 = vlaneseq
        %v596 = vshrl.u32 %v595, 7
        %v597 = vsub.s32 0, %v596
        %v598 = vrot.slane %v593, %v597
        %v600 = vadd.f32 %v561, %v598
        %v601 = vadd.f32 %v562, %v598
        %v602 = vadd.f32 %v563, %v598
        %v603 = vadd.f32 %v564, %v598
        %v604 = vadd.f32 %v565, %v598
        %v605 = vadd.f32 %v566, %v598
        %v606 = vadd.f32 %v567, %v598
        %v607 = vadd.f32 %v568, %v598
        %v608 = vadd.f32 %v569, %v598
        %v609 = vadd.f32 %v570, %v598
        %v610 = vadd.f32 %v571, %v598
        %v611 = vadd.f32 %v572, %v598
        %v612 = vadd.f32 %v573, %v598
        %v613 = vadd.f32 %v574, %v598
        %v614 = vadd.f32 %v575, %v598
        %v615 = vadd.f32 %v576, %v598
        %v616 = vadd.f32 %v577, %v598
        %v617 = vadd.f32 %v578, %v598
        %v618 = vadd.f32 %v579, %v598
        %v619 = vadd.f32 %v580, %v598
        %v620 = vadd.f32 %v581, %v598
        %v621 = vadd.f32 %v582, %v598
        %v622 = vadd.f32 %v583, %v598
        %v623 = vadd.f32 %v584, %v598
        %v624 = vadd.f32 %v585, %v598
        %v625 = vadd.f32 %v586, %v598
        %v626 = vadd.f32 %v587, %v598
        %v627 = vadd.f32 %v588, %v598
        %v628 = vadd.f32 %v589, %v598
        %v629 = vadd.f32 %v590, %v598
        %v630 = vadd.f32 %v591, %v598
        %v631 = vadd.f32 %v592, %v598
        %v632 = vmax.f32 %v600, 0.0
        %v633 = vmax.f32 %v601, 0.0
        %v634 = vmax.f32 %v602, 0.0
        %v635 = vmax.f32 %v603, 0.0
        %v636 = vmax.f32 %v604, 0.0
        %v637 = vmax.f32 %v605, 0.0
        %v638 = vmax.f32 %v606, 0.0
        %v639 = vmax.f32 %v607, 0.0
        %v640 = vmax.f32 %v608, 0.0
        %v641 = vmax.f32 %v609, 0.0
        %v642 = vmax.f32 %v610, 0.0
        %v643 = vmax.f32 %v611, 0.0
        %v644 = vmax.f32 %v612, 0.0
        %v645 = vmax.f32 %v613, 0.0
        %v646 = vmax.f32 %v614, 0.0
        %v647 = vmax.f32 %v615, 0.0
        %v648 = vmax.f32 %v616, 0.0
        %v649 = vmax.f32 %v617, 0.0
        %v650 = vmax.f32 %v618, 0.0
        %v651 = vmax.f32 %v619, 0.0
        %v652 = vmax.f32 %v620, 0.0
        %v653 = vmax.f32 %v621, 0.0
        %v654 = vmax.f32 %v622, 0.0
        %v655 = vmax.f32 %v623, 0.0
        %v656 = vmax.f32 %v624, 0.0
        %v657 = vmax.f32 %v625, 0.0
        %v658 = vmax.f32 %v626, 0.0
        %v659 = vmax.f32 %v627, 0.0
        %v660 = vmax.f32 %v628, 0.0
        %v661 = vmax.f32 %v629, 0.0
        %v662 = vmax.f32 %v630, 0.0
        %v663 = vmax.f32 %v631, 0.0
        %v664 = vpack.c.bf16 %v633, %v632
        %v665 = vpack.c.bf16 %v635, %v634
        %v666 = vpack.c.bf16 %v637, %v636
        %v667 = vpack.c.bf16 %v639, %v638
        %v668 = vpack.c.bf16 %v641, %v640
        %v669 = vpack.c.bf16 %v643, %v642
        %v670 = vpack.c.bf16 %v645, %v644
        %v671 = vpack.c.bf16 %v647, %v646
        %v672 = vpack.c.bf16 %v649, %v648
        %v673 = vpack.c.bf16 %v651, %v650
        %v674 = vpack.c.bf16 %v653, %v652
        %v675 = vpack.c.bf16 %v655, %v654
        %v676 = vpack.c.bf16 %v657, %v656
        %v677 = vpack.c.bf16 %v659, %v658
        %v678 = vpack.c.bf16 %v661, %v660
        %v679 = vpack.c.bf16 %v663, %v662
        %v696 = vunpack.c.l.b16 %v664
        %v697 = vunpack.c.h.b16 %v664
        %v698 = vunpack.c.l.b16 %v665
        %v699 = vunpack.c.h.b16 %v665
        %v700 = vunpack.c.l.b16 %v666
        %v701 = vunpack.c.h.b16 %v666
        %v702 = vunpack.c.l.b16 %v667
        %v703 = vunpack.c.h.b16 %v667
        %v704 = vunpack.c.l.b16 %v668
        %v705 = vunpack.c.h.b16 %v668
        %v706 = vunpack.c.l.b16 %v669
        %v707 = vunpack.c.h.b16 %v669
        %v708 = vunpack.c.l.b16 %v670
        %v709 = vunpack.c.h.b16 %v670
        %v710 = vunpack.c.l.b16 %v671
        %v711 = vunpack.c.h.b16 %v671
        %v712 = vunpack.c.l.b16 %v672
        %v713 = vunpack.c.h.b16 %v672
        %v714 = vunpack.c.l.b16 %v673
        %v715 = vunpack.c.h.b16 %v673
        %v716 = vunpack.c.l.b16 %v674
        %v717 = vunpack.c.h.b16 %v674
        %v718 = vunpack.c.l.b16 %v675
        %v719 = vunpack.c.h.b16 %v675
        %v720 = vunpack.c.l.b16 %v676
        %v721 = vunpack.c.h.b16 %v676
        %v722 = vunpack.c.l.b16 %v677
        %v723 = vunpack.c.h.b16 %v677
        %v724 = vunpack.c.l.b16 %v678
        %v725 = vunpack.c.h.b16 %v678
        %v726 = vunpack.c.l.b16 %v679
        %v727 = vunpack.c.h.b16 %v679
        %v728 = vpack.c.b16 %v696, %v696
        %v729 = vpack.c.b16 %v697, %v697
        %v730 = vpack.c.b16 %v698, %v698
        %v731 = vpack.c.b16 %v699, %v699
        %v732 = vpack.c.b16 %v700, %v700
        %v733 = vpack.c.b16 %v701, %v701
        %v734 = vpack.c.b16 %v702, %v702
        %v735 = vpack.c.b16 %v703, %v703
        %v736 = vpack.c.b16 %v704, %v704
        %v737 = vpack.c.b16 %v705, %v705
        %v738 = vpack.c.b16 %v706, %v706
        %v739 = vpack.c.b16 %v707, %v707
        %v740 = vpack.c.b16 %v708, %v708
        %v741 = vpack.c.b16 %v709, %v709
        %v742 = vpack.c.b16 %v710, %v710
        %v743 = vpack.c.b16 %v711, %v711
        %v744 = vpack.c.b16 %v712, %v712
        %v745 = vpack.c.b16 %v713, %v713
        %v746 = vpack.c.b16 %v714, %v714
        %v747 = vpack.c.b16 %v715, %v715
        %v748 = vpack.c.b16 %v716, %v716
        %v749 = vpack.c.b16 %v717, %v717
        %v750 = vpack.c.b16 %v718, %v718
        %v751 = vpack.c.b16 %v719, %v719
        %v752 = vpack.c.b16 %v720, %v720
        %v753 = vpack.c.b16 %v721, %v721
        %v754 = vpack.c.b16 %v722, %v722
        %v755 = vpack.c.b16 %v723, %v723
        %v756 = vpack.c.b16 %v724, %v724
        %v757 = vpack.c.b16 %v725, %v725
        %v758 = vpack.c.b16 %v726, %v726
        %v759 = vpack.c.b16 %v727, %v727
        %792 = vst [vmem:[%s191] sm:$0xf] %v728
        %793 = vst [vmem:[%s191 + $0x4] sm:$0xf] %v729
        %794 = vst [vmem:[%s191 + $0x8] sm:$0xf] %v730
        %795 = vst [vmem:[%s191 + $0xc] sm:$0xf] %v731
        %796 = vst [vmem:[%s191 + $0x10] sm:$0xf] %v732
        %797 = vst [vmem:[%s191 + $0x14] sm:$0xf] %v733
        %798 = vst [vmem:[%s191 + $0x18] sm:$0xf] %v734
        %799 = vst [vmem:[%s191 + $0x1c] sm:$0xf] %v735
        %800 = vst [vmem:[%s191 + $0x20] sm:$0xf] %v736
        %801 = vst [vmem:[%s191 + $0x24] sm:$0xf] %v737
        %802 = vst [vmem:[%s191 + $0x28] sm:$0xf] %v738
        %803 = vst [vmem:[%s191 + $0x2c] sm:$0xf] %v739
        %804 = vst [vmem:[%s191 + $0x30] sm:$0xf] %v740
        %805 = vst [vmem:[%s191 + $0x34] sm:$0xf] %v741
        %806 = vst [vmem:[%s191 + $0x38] sm:$0xf] %v742
        %807 = vst [vmem:[%s191 + $0x3c] sm:$0xf] %v743
        %808 = vst [vmem:[%s191 + $0x40] sm:$0xf] %v744
        %809 = vst [vmem:[%s191 + $0x44] sm:$0xf] %v745
        %810 = vst [vmem:[%s191 + $0x48] sm:$0xf] %v746
        %811 = vst [vmem:[%s191 + $0x4c] sm:$0xf] %v747
        %812 = vst [vmem:[%s191 + $0x50] sm:$0xf] %v748
        %813 = vst [vmem:[%s191 + $0x54] sm:$0xf] %v749
        %814 = vst [vmem:[%s191 + $0x58] sm:$0xf] %v750
        %815 = vst [vmem:[%s191 + $0x5c] sm:$0xf] %v751
        %816 = vst [vmem:[%s191 + $0x60] sm:$0xf] %v752
        %817 = vst [vmem:[%s191 + $0x64] sm:$0xf] %v753
        %818 = vst [vmem:[%s191 + $0x68] sm:$0xf] %v754
        %819 = vst [vmem:[%s191 + $0x6c] sm:$0xf] %v755
        %820 = vst [vmem:[%s191 + $0x70] sm:$0xf] %v756
        %821 = vst [vmem:[%s191 + $0x74] sm:$0xf] %v757
        %822 = vst [vmem:[%s191 + $0x78] sm:$0xf] %v758
        %823 = vst [vmem:[%s191 + $0x7c] sm:$0xf] %v759
        %s824 = sand.u32 %s115, 1
        %s825 = scalar_lea.sflag [#allocation3], %s824
        %s826 = sand.u32 %s115, 1
        %s827 = smul.addr %s826, 128
        %s828 = scalar_lea.vmem [#allocation2], %s827
        // Predicated region
        $region37: #{tpu_custom_call.1} parent=35 // pred_check
          %p829 = pneg %p125
        $region38: #{tpu_custom_call.1} parent=35 // pred_check_branch
          %831 = sbr.rel (%p829) target = $region40
        $region39: #{tpu_custom_call.1} parent=35 // pred_region
          %s832 = smul.u32 32, %s18
          %s834 = ssub.s32 2048, 2048
          %835 = vsyncadd %s825, %s834
          %s836 = smul.addr %s832, 64
          %s837 = scalar_lea.hbm %s4, %s836
          %s838 = sshll.u32 %s828, 4
          %s839 = int_to_ptr.vmem [resolvable:$true] %s838
          %844 = dma.vmem_to_hbm [thread:$0]  %s839, 2048, %s837, %s825, 64, 64, 4
        $region40: #{tpu_custom_call.1} parent=35 // pred_fallthru
          _
      $region36: #{tpu_custom_call.1} parent=5 // pred_fallthru
        _
      %p845 = scmp.le.s32.totalorder 2, %s13
      // Predicated region
      $region41: #{tpu_custom_call.1} parent=5 // pred_check
        %p846 = pneg %p845
      $region42: #{tpu_custom_call.1} parent=5 // pred_check_branch
        %848 = sbr.rel (%p846) target = $region44
      $region43: #{tpu_custom_call.1} parent=5 // pred_region
        %s849 = ssub.s32 %s13, 2
        // Predicated region
        $region45: #{tpu_custom_call.1} parent=43 // pred_check
          %p850 = pneg %p131
        $region46: #{tpu_custom_call.1} parent=43 // pred_check_branch
          %852 = sbr.rel (%p850) target = $region48
        $region47: #{tpu_custom_call.1} parent=43 // pred_region
          %s853 = sand.u32 %s116, 1
          %s854 = scalar_lea.sflag [#allocation3], %s853
          %s855 = sand.u32 %s116, 1
          %s856 = smul.addr %s855, 128
          %s857 = scalar_lea.vmem [#allocation2], %s856
          %858 = dma.done %s854, 2048
        $region48: #{tpu_custom_call.1} parent=43 // pred_fallthru
          _
      $region44: #{tpu_custom_call.1} parent=5 // pred_fallthru
        _
    $region6: #{tpu_custom_call.1} parent=1 // loop_footer
      %s17 = sadd.s32 1, %s13
    $region7: #{tpu_custom_call.1} parent=1 // loop_footer_branch
      %12 = sbr.rel target = $region3
    $region8: #{tpu_custom_call.1} parent=1 // loop_exit
      _
    %859 = vsyncpa [#allocation3], 1
    %s860 = scalar_lea.sflag [#allocation3], 1
    %861 = vsyncpa %s860, 1

</llo_original>
